<compile_context>
chip_gen: v7x
topology: tpu7x:2x2x1
jax: 0.10.0
libtpu: 0.0.40
codegen_flags: <defaults>
</compile_context>

<pallas_src>
import functools

import jax
import jax.numpy as jnp
from jax.experimental import pallas as pl
from jax.experimental.pallas import tpu as pltpu


def _round_up(x: int, m: int) -> int:
    return ((x + m - 1) // m) * m


# ----------------------------------------------------------------------------
# Pallas kernel: fused 3-stage MLP (3 matmuls, all padded/packed host-side)
# ----------------------------------------------------------------------------
def _ppg_kernel(obs_ref, w_ref, b_ref, state_ref, head_ref, *, dims):
    OBS_P = dims["OBS_P"]
    S1 = dims["S1"]          # 3 * REPR_P   (concat of the 3 representation states)
    S2 = dims["S2"]          # AH_P + 2*CH_P (concat of the 3 hidden layers)
    OUT_P = dims["OUT_P"]    # padded [logits | v | aux_v] width
    REPR_P = dims["REPR_P"]

    x = obs_ref[...]                                        # (TILE_B, OBS_P)

    # Static ref-slices into the packed buffers (pre-transposed, lane-aligned).
    w1 = w_ref[0:OBS_P, 0:S1]                               # (OBS_P, S1)
    w2 = w_ref[OBS_P:OBS_P + S1, 0:S2]                      # (S1, S2)  block-diag
    w3 = w_ref[OBS_P + S1:OBS_P + S1 + S2, 0:OUT_P]         # (S2, OUT_P) block-diag

    b1 = b_ref[0:1, 0:S1]
    b2 = b_ref[1:2, 0:S2]
    b3 = b_ref[2:3, 0:OUT_P]

    # Stage 1: the three representation Linears fused into one matmul + ReLU.
    s = jnp.maximum(jnp.dot(x, w1, preferred_element_type=jnp.float32) + b1, 0.0)
    # Stage 2: actor/critic/aux hidden Linears fused (block-diagonal) + ReLU.
    h = jnp.maximum(jnp.dot(s, w2, preferred_element_type=jnp.float32) + b2, 0.0)
    # Stage 3: output heads fused -> lane-dense [logits | v | aux_v | 0...].
    out = jnp.dot(h, w3, preferred_element_type=jnp.float32) + b3

    state_ref[...] = s[:, 0:REPR_P]                         # actor representation state
    head_ref[...] = out


# ----------------------------------------------------------------------------
# One-time host-side parameter packing (pre-transpose + fuse + pad)
# ----------------------------------------------------------------------------
def pack_params(p, obs_dim, repr_dim, actor_hidden, critic_hidden, action_dim):
    OBS_P = _round_up(obs_dim, 128)
    REPR_P = _round_up(repr_dim, 128)
    AH_P = _round_up(actor_hidden, 128)
    CH_P = _round_up(critic_hidden, 128)
    OUT_P = _round_up(action_dim + 2, 128)
    S1 = 3 * REPR_P
    S2 = AH_P + 2 * CH_P
    W_COLS = max(S1, S2, OUT_P)

    f32 = jnp.float32

    # Stage 1 weights: obs -> [s_actor | s_crit | s_aux]
    w1 = jnp.zeros((OBS_P, S1), f32)
    w1 = w1.at[:obs_dim, 0 * REPR_P:0 * REPR_P + repr_dim].set(p["w_rep_a"].T)
    w1 = w1.at[:obs_dim, 1 * REPR_P:1 * REPR_P + repr_dim].set(p["w_rep_c"].T)
    w1 = w1.at[:obs_dim, 2 * REPR_P:2 * REPR_P + repr_dim].set(p["w_rep_x"].T)

    # Stage 2 weights (block-diagonal): states -> [h_actor | h_crit | h_aux]
    w2 = jnp.zeros((S1, S2), f32)
    w2 = w2.at[0 * REPR_P:0 * REPR_P + repr_dim, 0:actor_hidden].set(p["wa1"].T)
    w2 = w2.at[1 * REPR_P:1 * REPR_P + repr_dim, AH_P:AH_P + critic_hidden].set(p["wc1"].T)
    w2 = w2.at[2 * REPR_P:2 * REPR_P + repr_dim,
               AH_P + CH_P:AH_P + CH_P + critic_hidden].set(p["wx1"].T)

    # Stage 3 weights (block-diagonal): hiddens -> [logits | v | aux_v]
    w3 = jnp.zeros((S2, OUT_P), f32)
    w3 = w3.at[0:actor_hidden, 0:action_dim].set(p["wa2"].T)
    w3 = w3.at[AH_P:AH_P + critic_hidden, action_dim:action_dim + 1].set(p["wc2"].T)
    w3 = w3.at[AH_P + CH_P:AH_P + CH_P + critic_hidden,
               action_dim + 1:action_dim + 2].set(p["wx2"].T)

    def widen(w):
        return jnp.zeros((w.shape[0], W_COLS), f32).at[:, :w.shape[1]].set(w)

    w_packed = jnp.concatenate([widen(w1), widen(w2), widen(w3)], axis=0)

    def brow(b):
        return jnp.reshape(b, (-1,)).astype(f32)

    b_packed = jnp.zeros((8, W_COLS), f32)
    b_packed = b_packed.at[0, 0 * REPR_P:0 * REPR_P + repr_dim].set(brow(p["b_rep_a"]))
    b_packed = b_packed.at[0, 1 * REPR_P:1 * REPR_P + repr_dim].set(brow(p["b_rep_c"]))
    b_packed = b_packed.at[0, 2 * REPR_P:2 * REPR_P + repr_dim].set(brow(p["b_rep_x"]))
    b_packed = b_packed.at[1, 0:actor_hidden].set(brow(p["ba1"]))
    b_packed = b_packed.at[1, AH_P:AH_P + critic_hidden].set(brow(p["bc1"]))
    b_packed = b_packed.at[1, AH_P + CH_P:AH_P + CH_P + critic_hidden].set(brow(p["bx1"]))
    b_packed = b_packed.at[2, 0:action_dim].set(brow(p["ba2"]))
    b_packed = b_packed.at[2, action_dim].set(brow(p["bc2"])[0])
    b_packed = b_packed.at[2, action_dim + 1].set(brow(p["bx2"])[0])

    dims = dict(OBS_P=OBS_P, REPR_P=REPR_P, AH_P=AH_P, CH_P=CH_P,
                OUT_P=OUT_P, S1=S1, S2=S2, W_COLS=W_COLS,
                obs_dim=obs_dim, repr_dim=repr_dim, action_dim=action_dim)
    return w_packed, b_packed, dims


# ----------------------------------------------------------------------------
# Wrapper: pad obs, launch kernel over a parallel batch grid, unpack outputs
# ----------------------------------------------------------------------------
def ppg_actor_critic_forward(obs, w_packed, b_packed, dims, *, tile_b=512):
    # NOTE: on v7x (64 MiB VMEM, 2 TCs) a smaller tile_b (e.g. 256) may be
    # preferable at very large batch sizes; at these widths tile_b <= 2048 fits.
    B = obs.shape[0]
    OBS_P, REPR_P, OUT_P = dims["OBS_P"], dims["REPR_P"], dims["OUT_P"]
    obs_dim, repr_dim, action_dim = dims["obs_dim"], dims["repr_dim"], dims["action_dim"]

    tile_b = max(_round_up(tile_b, 8), 8)
    B_pad = max(_round_up(B, 8), 8)
    TILE_B = min(B_pad, tile_b)
    B_total = _round_up(B_pad, TILE_B)
    grid = (B_total // TILE_B,)

    obs_p = jnp.zeros((B_total, OBS_P), jnp.float32).at[:B, :obs_dim].set(
        obs.astype(jnp.float32))

    W_ROWS, W_COLS = w_packed.shape
    flops = 2 * B_total * (OBS_P * dims["S1"] + dims["S1"] * dims["S2"]
                           + dims["S2"] * OUT_P)
    bytes_accessed = 4 * (obs_p.size + w_packed.size + b_packed.size
                          + B_total * REPR_P + B_total * OUT_P)

    state_pad, head = pl.pallas_call(
        functools.partial(_ppg_kernel, dims=dims),
        out_shape=(
            jax.ShapeDtypeStruct((B_total, REPR_P), jnp.float32),   # padded policy state
            jax.ShapeDtypeStruct((B_total, OUT_P), jnp.float32),    # [logits | v | aux_v]
        ),
        grid=grid,
        in_specs=[
            pl.BlockSpec((TILE_B, OBS_P), lambda i: (i, 0)),
            pl.BlockSpec((W_ROWS, W_COLS), lambda i: (0, 0)),       # weights stay resident
            pl.BlockSpec((8, W_COLS), lambda i: (0, 0)),            # biases stay resident
        ],
        out_specs=(
            pl.BlockSpec((TILE_B, REPR_P), lambda i: (i, 0)),
            pl.BlockSpec((TILE_B, OUT_P), lambda i: (i, 0)),
        ),
        compiler_params=pltpu.CompilerParams(
            dimension_semantics=("parallel",)),
        cost_estimate=pl.CostEstimate(
            flops=flops, transcendentals=0, bytes_accessed=bytes_accessed),
    )(obs_p, w_packed, b_packed)

    state = state_pad[:B, :repr_dim]
    logits = head[:B, :action_dim]          # CategoricalDistribution logits
    v = head[:B, action_dim]                # CriticNet.forward(...)[:, 0]
    aux_v = head[:B, action_dim + 1]
    return {"state": state}, logits, v, aux_v


def make_forward_fn(dims, *, tile_b=512):
    """Returns a jitted forward: (obs, w_packed, b_packed) -> (outputs...)."""
    def fwd(obs, w_packed, b_packed):
        return ppg_actor_critic_forward(obs, w_packed, b_packed, dims, tile_b=tile_b)
    return jax.jit(fwd)


# ----------------------------------------------------------------------------
# Deterministic parameter construction (PyTorch nn.Linear shapes: W=(out,in))
# ----------------------------------------------------------------------------
def make_params(key, obs_dim, repr_dim, actor_hidden, critic_hidden, action_dim):
    def lin(k, out_d, in_d):
        k1, k2 = jax.random.split(k)
        w = jax.random.normal(k1, (out_d, in_d), jnp.float32) * 0.1
        b = jax.random.normal(k2, (1, out_d), jnp.float32) * 0.1
        return w, b

    keys = jax.random.split(key, 8)
    w_rep, b_rep = lin(keys[0], repr_dim, obs_dim)   # deep-copied 3x at init
    wa1, ba1 = lin(keys[1], actor_hidden, repr_dim)
    wa2, ba2 = lin(keys[2], action_dim, actor_hidden)
    wc1, bc1 = lin(keys[3], critic_hidden, repr_dim)
    wc2, bc2 = lin(keys[4], 1, critic_hidden)
    wx1, bx1 = lin(keys[5], critic_hidden, repr_dim)
    wx2, bx2 = lin(keys[6], 1, critic_hidden)

    return {
        "w_rep_a": w_rep, "b_rep_a": b_rep,
        "w_rep_c": w_rep, "b_rep_c": b_rep,
        "w_rep_x": w_rep, "b_rep_x": b_rep,
        "wa1": wa1, "ba1": ba1, "wa2": wa2, "ba2": ba2,
        "wc1": wc1, "bc1": bc1, "wc2": wc2, "bc2": bc2,
        "wx1": wx1, "bx1": bx1, "wx2": wx2, "bx2": bx2,
    }


# ----------------------------------------------------------------------------
# Pure-JAX reference (correctness check)
# ----------------------------------------------------------------------------
def reference_forward(obs, p):
    def lin(h, w, b, relu):
        y = h @ w.T + b
        return jnp.maximum(y, 0.0) if relu else y

    s_a = lin(obs, p["w_rep_a"], p["b_rep_a"], True)
    s_c = lin(obs, p["w_rep_c"], p["b_rep_c"], True)
    s_x = lin(obs, p["w_rep_x"], p["b_rep_x"], True)
    logits = lin(lin(s_a, p["wa1"], p["ba1"], True), p["wa2"], p["ba2"], False)
    v = lin(lin(s_c, p["wc1"], p["bc1"], True), p["wc2"], p["bc2"], False)[:, 0]
    aux_v = lin(lin(s_x, p["wx1"], p["bx1"], True), p["wx2"], p["bx2"], False)[:, 0]
    return s_a, logits, v, aux_v


if __name__ == "__main__":
    key = jax.random.PRNGKey(0)
    k_obs, k_par = jax.random.split(key)

    B, obs_dim, repr_dim = 8, 16, 32
    actor_hidden, critic_hidden, action_dim = 32, 32, 4

    obs = jax.random.normal(k_obs, (B, obs_dim), jnp.float32)
    params = make_params(k_par, obs_dim, repr_dim, actor_hidden, critic_hidden, action_dim)

    # One-time packing (pre-transpose, fuse, pad) — analogous to module init.
    w_packed, b_packed, dims = pack_params(
        params, obs_dim, repr_dim, actor_hidden, critic_hidden, action_dim)

    forward = make_forward_fn(dims, tile_b=512)
    policy_outputs, logits, v, aux_v = forward(obs, w_packed, b_packed)
    jax.block_until_ready((policy_outputs["state"], logits, v, aux_v))

    # Verify against pure-JAX reference.
    # TODO(synk): the PyTorch module returns a CategoricalDistribution object
    # for the actor; the kernel returns its logits (the distribution params).
    s_ref, logits_ref, v_ref, aux_v_ref = reference_forward(obs, params)
    assert policy_outputs["state"].shape == (B, repr_dim)
    assert logits.shape == (B, action_dim)
    assert v.shape == (B,) and aux_v.shape == (B,)
    assert jnp.allclose(policy_outputs["state"], s_ref, atol=1e-4, rtol=1e-4)
    assert jnp.allclose(logits, logits_ref, atol=1e-4, rtol=1e-4)
    assert jnp.allclose(v, v_ref, atol=1e-4, rtol=1e-4)
    assert jnp.allclose(aux_v, aux_v_ref, atol=1e-4, rtol=1e-4)

    print("KERNEL_OK")
</pallas_src>

<mosaic_0001>
module attributes {stable_mosaic.version = 11 : i64} {
  func.func @_ppg_kernel(%arg0: i32, %arg1: memref<8x128xf32, #tpu.memory_space<vmem>>, %arg2: memref<896x384xf32, #tpu.memory_space<vmem>>, %arg3: memref<8x384xf32, #tpu.memory_space<vmem>>, %arg4: memref<8x128xf32, #tpu.memory_space<vmem>>, %arg5: memref<8x128xf32, #tpu.memory_space<vmem>>) attributes {dimension_semantics = [#tpu.dimension_semantics<parallel>], iteration_bounds = array<i64: 1>, scalar_prefetch = 0 : i64, scratch_operands = 0 : i64, tpu.core_type = #tpu.core_type<tc>, window_params = [{transform_indices = @transform_0, window_bounds = array<i64: 8, 128>}, {pipeline_mode = #tpu.pipeline_mode<synchronous>, transform_indices = @transform_1, window_bounds = array<i64: 896, 384>}, {pipeline_mode = #tpu.pipeline_mode<synchronous>, transform_indices = @transform_2, window_bounds = array<i64: 8, 384>}, {transform_indices = @transform_3, window_bounds = array<i64: 8, 128>}, {transform_indices = @transform_4, window_bounds = array<i64: 8, 128>}]} {
    %c0 = arith.constant 0 : index
    %c0_0 = arith.constant 0 : index
    %0 = vector.load %arg1[%c0, %c0_0] : memref<8x128xf32, #tpu.memory_space<vmem>>, vector<8x128xf32>
    %c0_1 = arith.constant 0 : index
    %c0_2 = arith.constant 0 : index
    %1 = vector.load %arg2[%c0_1, %c0_2] : memref<896x384xf32, #tpu.memory_space<vmem>>, vector<128x384xf32>
    %c128 = arith.constant 128 : index
    %c0_3 = arith.constant 0 : index
    %2 = vector.load %arg2[%c128, %c0_3] : memref<896x384xf32, #tpu.memory_space<vmem>>, vector<384x384xf32>
    %c512 = arith.constant 512 : index
    %c0_4 = arith.constant 0 : index
    %3 = vector.load %arg2[%c512, %c0_4] : memref<896x384xf32, #tpu.memory_space<vmem>>, vector<384x128xf32>
    %c0_5 = arith.constant 0 : index
    %c0_6 = arith.constant 0 : index
    %4 = vector.load %arg3[%c0_5, %c0_6] : memref<8x384xf32, #tpu.memory_space<vmem>>, vector<1x384xf32>
    %c1 = arith.constant 1 : index
    %c0_7 = arith.constant 0 : index
    %5 = vector.load %arg3[%c1, %c0_7] : memref<8x384xf32, #tpu.memory_space<vmem>>, vector<1x384xf32>
    %c2 = arith.constant 2 : index
    %c0_8 = arith.constant 0 : index
    %6 = vector.load %arg3[%c2, %c0_8] : memref<8x384xf32, #tpu.memory_space<vmem>>, vector<1x128xf32>
    %cst = arith.constant dense<0.000000e+00> : vector<8x384xf32>
    %7 = tpu.matmul %0, %1, %cst {dimension_numbers = #tpu.dot_dimension_numbers<[1], [0], [0], [1], [0, 0, 1, 1], [], []>} : vector<8x128xf32>, vector<128x384xf32>, vector<8x384xf32> -> vector<8x384xf32>
    %8 = vector.broadcast %4 : vector<1x384xf32> to vector<8x384xf32>
    %9 = arith.addf %7, %8 : vector<8x384xf32>
    %cst_9 = arith.constant 0.000000e+00 : f32
    %10 = vector.broadcast %cst_9 : f32 to vector<8x384xf32>
    %11 = arith.maximumf %9, %10 : vector<8x384xf32>
    %cst_10 = arith.constant dense<0.000000e+00> : vector<8x384xf32>
    %12 = tpu.matmul %11, %2, %cst_10 {dimension_numbers = #tpu.dot_dimension_numbers<[1], [0], [0], [1], [0, 0, 1, 1], [], []>} : vector<8x384xf32>, vector<384x384xf32>, vector<8x384xf32> -> vector<8x384xf32>
    %13 = vector.broadcast %5 : vector<1x384xf32> to vector<8x384xf32>
    %14 = arith.addf %12, %13 : vector<8x384xf32>
    %cst_11 = arith.constant 0.000000e+00 : f32
    %15 = vector.broadcast %cst_11 : f32 to vector<8x384xf32>
    %16 = arith.maximumf %14, %15 : vector<8x384xf32>
    %cst_12 = arith.constant dense<0.000000e+00> : vector<8x128xf32>
    %17 = tpu.matmul %16, %3, %cst_12 {dimension_numbers = #tpu.dot_dimension_numbers<[1], [0], [0], [1], [0, 0, 1, 1], [], []>} : vector<8x384xf32>, vector<384x128xf32>, vector<8x128xf32> -> vector<8x128xf32>
    %18 = vector.broadcast %6 : vector<1x128xf32> to vector<8x128xf32>
    %19 = arith.addf %17, %18 : vector<8x128xf32>
    %20 = vector.extract_strided_slice %11 {offsets = [0, 0], sizes = [8, 128], strides = [1, 1]} : vector<8x384xf32> to vector<8x128xf32>
    %c0_13 = arith.constant 0 : index
    %c0_14 = arith.constant 0 : index
    %21 = vector.load %arg4[%c0_13, %c0_14] : memref<8x128xf32, #tpu.memory_space<vmem>>, vector<8x128xf32>
    tpu.vector_store %arg4[%c0_13, %c0_14], %20 {strides = array<i32>} : memref<8x128xf32, #tpu.memory_space<vmem>>, vector<8x128xf32>,
    %c0_15 = arith.constant 0 : index
    %c0_16 = arith.constant 0 : index
    %22 = vector.load %arg5[%c0_15, %c0_16] : memref<8x128xf32, #tpu.memory_space<vmem>>, vector<8x128xf32>
    tpu.vector_store %arg5[%c0_15, %c0_16], %19 {strides = array<i32>} : memref<8x128xf32, #tpu.memory_space<vmem>>, vector<8x128xf32>,
    return
  }
  func.func @transform_0(%arg0: i32) -> (i32, i32) {
    %c0_i32 = arith.constant 0 : i32
    %c0_i32_0 = arith.constant 0 : i32
    return %arg0, %c0_i32 : i32, i32
  }
  func.func @transform_1(%arg0: i32) -> (i32, i32) {
    %c0_i32 = arith.constant 0 : i32
    %c0_i32_0 = arith.constant 0 : i32
    %c0_i32_1 = arith.constant 0 : i32
    return %c0_i32, %c0_i32_0 : i32, i32
  }
  func.func @transform_2(%arg0: i32) -> (i32, i32) {
    %c0_i32 = arith.constant 0 : i32
    %c0_i32_0 = arith.constant 0 : i32
    %c0_i32_1 = arith.constant 0 : i32
    return %c0_i32, %c0_i32_0 : i32, i32
  }
  func.func @transform_3(%arg0: i32) -> (i32, i32) {
    %c0_i32 = arith.constant 0 : i32
    %c0_i32_0 = arith.constant 0 : i32
    return %arg0, %c0_i32 : i32, i32
  }
  func.func @transform_4(%arg0: i32) -> (i32, i32) {
    %c0_i32 = arith.constant 0 : i32
    %c0_i32_0 = arith.constant 0 : i32
    return %arg0, %c0_i32 : i32, i32
  }
}

</mosaic_0001>

<llo_original>
// kernel: fwd.1
$region0: #{fwd.1}
  #allocation0 [shape = 'u32[]', space=smem, size = 0x4, offset = 0x4, fixed_abs, tag = 'smem constant byte address 0x4 - core index']
  #allocation1 [shape = 'u32[144,128]{1,0:T(1,128)}', space=vmem, size = 0x12000, scoped, tag = 'internal scratch']
  %s0 = inlined_call_operand.vmem [shape: f32[8,128], index: 0, kind: input, shape index: {}]
  %s1 = inlined_call_operand.hbm [shape: f32[896,384], index: 1, kind: input, shape index: {}]
  %s2 = inlined_call_operand.hbm [shape: f32[8,384], index: 2, kind: input, shape index: {}]
  %s3 = inlined_call_operand.hbm [shape: f32[8,128], index: 3, kind: output, shape index: {0}]
  %s4 = inlined_call_operand.vmem [shape: f32[8,128], index: 4, kind: output, shape index: {1}]
  %5 = xla_tuple %s3, %s4
  %s6 = sld [smem:[#allocation0]]
  $region38: #{fwd.1} parent=0
    _
  %s8 = ssub.s32 1, %s6
  %s9 = scalar_select 0, %s8, %s6
  $region1: #{fwd.1} parent=0
    #allocation2 [shape = 'u8[1376256]{0}', space=vmem, size = 0x150000, scoped, tag = 'input window, operand 1, single buffered']
    #allocation3 [shape = 's32[1]{0}', space=sflag, size = 0x4, scoped, tag = 'scoped memory for fwd.1']
    #allocation4 [shape = 's32[1]{0}', space=sflag, size = 0x4, scoped, tag = 'scoped memory for fwd.1']
    #allocation5 [shape = 'u8[12288]{0}', space=vmem, size = 0x3000, scoped, tag = 'input window, operand 2, single buffered']
    #allocation6 [shape = 's32[1]{0}', space=sflag, size = 0x4, scoped, tag = 'scoped memory for fwd.1']
    #allocation7 [shape = 'u8[4096]{0}', space=vmem, size = 0x1000, scoped, tag = 'output window, operand 0, single buffered']
    %10 = vsyncpa [#allocation3], 0
    %11 = vsyncpa [#allocation6], 0
    %12 = vsyncpa [#allocation4], 0
    // Predicated region
    $region2: #{fwd.1} parent=1 // pred_check
      _
    $region3: #{fwd.1} parent=1 // pred_check_branch
      %14 = sbr.rel (0) target = $region5
    $region4: #{fwd.1} parent=1 // pred_region
      _
    $region5: #{fwd.1} parent=1 // pred_fallthru
      _
    // Predicated region
    $region6: #{fwd.1} parent=1 // pred_check
      _
    $region7: #{fwd.1} parent=1 // pred_check_branch
      %16 = sbr.rel (0) target = $region9
    $region8: #{fwd.1} parent=1 // pred_region
      %s18 = ssub.s32 43008, 43008
      %19 = vsyncadd [#allocation3], %s18
      %s20 = sshll.u32 [#allocation2], 4
      %s21 = int_to_ptr.vmem [resolvable:$true] %s20
      %26 = dma.hbm_to_vmem [thread:$0]  %s1, 43008, %s21, [#allocation3], 384, 384, 24
    $region9: #{fwd.1} parent=1 // pred_fallthru
      _
    // Predicated region
    $region10: #{fwd.1} parent=1 // pred_check
      _
    $region11: #{fwd.1} parent=1 // pred_check_branch
      %28 = sbr.rel (0) target = $region13
    $region12: #{fwd.1} parent=1 // pred_region
      %s30 = ssub.s32 384, 384
      %31 = vsyncadd [#allocation6], %s30
      %s33 = sshll.u32 [#allocation5], 4
      %s34 = int_to_ptr.vmem [resolvable:$true] %s33
      %36 = dma.hbm_to_vmem [thread:$0]  %s2, 384, %s34, [#allocation6]
    $region13: #{fwd.1} parent=1 // pred_fallthru
      _
    // Predicated region
    $region14: #{fwd.1} parent=1 // pred_check
      _
    $region15: #{fwd.1} parent=1 // pred_check_branch
      %38 = sbr.rel (0) target = $region17
    $region16: #{fwd.1} parent=1 // pred_region
      %39 = dma.done [#allocation3], 43008
    $region17: #{fwd.1} parent=1 // pred_fallthru
      _
    // Predicated region
    $region18: #{fwd.1} parent=1 // pred_check
      _
    $region19: #{fwd.1} parent=1 // pred_check_branch
      %41 = sbr.rel (0) target = $region21
    $region20: #{fwd.1} parent=1 // pred_region
      %42 = dma.done [#allocation6], 384
    $region21: #{fwd.1} parent=1 // pred_fallthru
      _
    %v43 = vld [vmem:[%s0] sm:$0xff]
    %v44 = vld [vmem:[#allocation2] sm:$0xff]
    %v45 = vld [vmem:[#allocation2 + $0x8] sm:$0xff]
    %v46 = vld [vmem:[#allocation2 + $0x10] sm:$0xff]
    %v47 = vld [vmem:[#allocation2 + $0x18] sm:$0xff]
    %v48 = vld [vmem:[#allocation2 + $0x20] sm:$0xff]
    %v49 = vld [vmem:[#allocation2 + $0x28] sm:$0xff]
    %v50 = vld [vmem:[#allocation2 + $0x30] sm:$0xff]
    %v51 = vld [vmem:[#allocation2 + $0x38] sm:$0xff]
    %v52 = vld [vmem:[#allocation2 + $0x40] sm:$0xff]
    %v53 = vld [vmem:[#allocation2 + $0x48] sm:$0xff]
    %v54 = vld [vmem:[#allocation2 + $0x50] sm:$0xff]
    %v55 = vld [vmem:[#allocation2 + $0x58] sm:$0xff]
    %v56 = vld [vmem:[#allocation2 + $0x60] sm:$0xff]
    %v57 = vld [vmem:[#allocation2 + $0x68] sm:$0xff]
    %v58 = vld [vmem:[#allocation2 + $0x70] sm:$0xff]
    %v59 = vld [vmem:[#allocation2 + $0x78] sm:$0xff]
    %v60 = vld [vmem:[#allocation2 + $0x80] sm:$0xff]
    %v61 = vld [vmem:[#allocation2 + $0x88] sm:$0xff]
    %v62 = vld [vmem:[#allocation2 + $0x90] sm:$0xff]
    %v63 = vld [vmem:[#allocation2 + $0x98] sm:$0xff]
    %v64 = vld [vmem:[#allocation2 + $0xa0] sm:$0xff]
    %v65 = vld [vmem:[#allocation2 + $0xa8] sm:$0xff]
    %v66 = vld [vmem:[#allocation2 + $0xb0] sm:$0xff]
    %v67 = vld [vmem:[#allocation2 + $0xb8] sm:$0xff]
    %v68 = vld [vmem:[#allocation2 + $0xc0] sm:$0xff]
    %v69 = vld [vmem:[#allocation2 + $0xc8] sm:$0xff]
    %v70 = vld [vmem:[#allocation2 + $0xd0] sm:$0xff]
    %v71 = vld [vmem:[#allocation2 + $0xd8] sm:$0xff]
    %v72 = vld [vmem:[#allocation2 + $0xe0] sm:$0xff]
    %v73 = vld [vmem:[#allocation2 + $0xe8] sm:$0xff]
    %v74 = vld [vmem:[#allocation2 + $0xf0] sm:$0xff]
    %v75 = vld [vmem:[#allocation2 + $0xf8] sm:$0xff]
    %v76 = vld [vmem:[#allocation2 + $0x100] sm:$0xff]
    %v77 = vld [vmem:[#allocation2 + $0x108] sm:$0xff]
    %v78 = vld [vmem:[#allocation2 + $0x110] sm:$0xff]
    %v79 = vld [vmem:[#allocation2 + $0x118] sm:$0xff]
    %v80 = vld [vmem:[#allocation2 + $0x120] sm:$0xff]
    %v81 = vld [vmem:[#allocation2 + $0x128] sm:$0xff]
    %v82 = vld [vmem:[#allocation2 + $0x130] sm:$0xff]
    %v83 = vld [vmem:[#allocation2 + $0x138] sm:$0xff]
    %v84 = vld [vmem:[#allocation2 + $0x140] sm:$0xff]
    %v85 = vld [vmem:[#allocation2 + $0x148] sm:$0xff]
    %v86 = vld [vmem:[#allocation2 + $0x150] sm:$0xff]
    %v87 = vld [vmem:[#allocation2 + $0x158] sm:$0xff]
    %v88 = vld [vmem:[#allocation2 + $0x160] sm:$0xff]
    %v89 = vld [vmem:[#allocation2 + $0x168] sm:$0xff]
    %v90 = vld [vmem:[#allocation2 + $0x170] sm:$0xff]
    %v91 = vld [vmem:[#allocation2 + $0x178] sm:$0xff]
    %v92 = vld [vmem:[#allocation2 + $0x180] sm:$0xff]
    %v93 = vld [vmem:[#allocation2 + $0x188] sm:$0xff]
    %v94 = vld [vmem:[#allocation2 + $0x190] sm:$0xff]
    %v95 = vld [vmem:[#allocation2 + $0x198] sm:$0xff]
    %v96 = vld [vmem:[#allocation2 + $0x1a0] sm:$0xff]
    %v97 = vld [vmem:[#allocation2 + $0x1a8] sm:$0xff]
    %v98 = vld [vmem:[#allocation2 + $0x1b0] sm:$0xff]
    %v99 = vld [vmem:[#allocation2 + $0x1b8] sm:$0xff]
    %v100 = vld [vmem:[#allocation2 + $0x1c0] sm:$0xff]
    %v101 = vld [vmem:[#allocation2 + $0x1c8] sm:$0xff]
    %v102 = vld [vmem:[#allocation2 + $0x1d0] sm:$0xff]
    %v103 = vld [vmem:[#allocation2 + $0x1d8] sm:$0xff]
    %v104 = vld [vmem:[#allocation2 + $0x1e0] sm:$0xff]
    %v105 = vld [vmem:[#allocation2 + $0x1e8] sm:$0xff]
    %v106 = vld [vmem:[#allocation2 + $0x1f0] sm:$0xff]
    %v107 = vld [vmem:[#allocation2 + $0x1f8] sm:$0xff]
    %v108 = vld [vmem:[#allocation2 + $0x200] sm:$0xff]
    %v109 = vld [vmem:[#allocation2 + $0x208] sm:$0xff]
    %v110 = vld [vmem:[#allocation2 + $0x210] sm:$0xff]
    %v111 = vld [vmem:[#allocation2 + $0x218] sm:$0xff]
    %v112 = vld [vmem:[#allocation2 + $0x220] sm:$0xff]
    %v113 = vld [vmem:[#allocation2 + $0x228] sm:$0xff]
    %v114 = vld [vmem:[#allocation2 + $0x230] sm:$0xff]
    %v115 = vld [vmem:[#allocation2 + $0x238] sm:$0xff]
    %v116 = vld [vmem:[#allocation2 + $0x240] sm:$0xff]
    %v117 = vld [vmem:[#allocation2 + $0x248] sm:$0xff]
    %v118 = vld [vmem:[#allocation2 + $0x250] sm:$0xff]
    %v119 = vld [vmem:[#allocation2 + $0x258] sm:$0xff]
    %v120 = vld [vmem:[#allocation2 + $0x260] sm:$0xff]
    %v121 = vld [vmem:[#allocation2 + $0x268] sm:$0xff]
    %v122 = vld [vmem:[#allocation2 + $0x270] sm:$0xff]
    %v123 = vld [vmem:[#allocation2 + $0x278] sm:$0xff]
    %v124 = vld [vmem:[#allocation2 + $0x280] sm:$0xff]
    %v125 = vld [vmem:[#allocation2 + $0x288] sm:$0xff]
    %v126 = vld [vmem:[#allocation2 + $0x290] sm:$0xff]
    %v127 = vld [vmem:[#allocation2 + $0x298] sm:$0xff]
    %v128 = vld [vmem:[#allocation2 + $0x2a0] sm:$0xff]
    %v129 = vld [vmem:[#allocation2 + $0x2a8] sm:$0xff]
    %v130 = vld [vmem:[#allocation2 + $0x2b0] sm:$0xff]
    %v131 = vld [vmem:[#allocation2 + $0x2b8] sm:$0xff]
    %v132 = vld [vmem:[#allocation2 + $0x2c0] sm:$0xff]
    %v133 = vld [vmem:[#allocation2 + $0x2c8] sm:$0xff]
    %v134 = vld [vmem:[#allocation2 + $0x2d0] sm:$0xff]
    %v135 = vld [vmem:[#allocation2 + $0x2d8] sm:$0xff]
    %v136 = vld [vmem:[#allocation2 + $0x2e0] sm:$0xff]
    %v137 = vld [vmem:[#allocation2 + $0x2e8] sm:$0xff]
    %v138 = vld [vmem:[#allocation2 + $0x2f0] sm:$0xff]
    %v139 = vld [vmem:[#allocation2 + $0x2f8] sm:$0xff]
    %v140 = vld [vmem:[#allocation2 + $0x300] sm:$0xff]
    %v141 = vld [vmem:[#allocation2 + $0x308] sm:$0xff]
    %v142 = vld [vmem:[#allocation2 + $0x310] sm:$0xff]
    %v143 = vld [vmem:[#allocation2 + $0x318] sm:$0xff]
    %v144 = vld [vmem:[#allocation2 + $0x320] sm:$0xff]
    %v145 = vld [vmem:[#allocation2 + $0x328] sm:$0xff]
    %v146 = vld [vmem:[#allocation2 + $0x330] sm:$0xff]
    %v147 = vld [vmem:[#allocation2 + $0x338] sm:$0xff]
    %v148 = vld [vmem:[#allocation2 + $0x340] sm:$0xff]
    %v149 = vld [vmem:[#allocation2 + $0x348] sm:$0xff]
    %v150 = vld [vmem:[#allocation2 + $0x350] sm:$0xff]
    %v151 = vld [vmem:[#allocation2 + $0x358] sm:$0xff]
    %v152 = vld [vmem:[#allocation2 + $0x360] sm:$0xff]
    %v153 = vld [vmem:[#allocation2 + $0x368] sm:$0xff]
    %v154 = vld [vmem:[#allocation2 + $0x370] sm:$0xff]
    %v155 = vld [vmem:[#allocation2 + $0x378] sm:$0xff]
    %v156 = vld [vmem:[#allocation2 + $0x380] sm:$0xff]
    %v157 = vld [vmem:[#allocation2 + $0x388] sm:$0xff]
    %v158 = vld [vmem:[#allocation2 + $0x390] sm:$0xff]
    %v159 = vld [vmem:[#allocation2 + $0x398] sm:$0xff]
    %v160 = vld [vmem:[#allocation2 + $0x3a0] sm:$0xff]
    %v161 = vld [vmem:[#allocation2 + $0x3a8] sm:$0xff]
    %v162 = vld [vmem:[#allocation2 + $0x3b0] sm:$0xff]
    %v163 = vld [vmem:[#allocation2 + $0x3b8] sm:$0xff]
    %v164 = vld [vmem:[#allocation2 + $0x3c0] sm:$0xff]
    %v165 = vld [vmem:[#allocation2 + $0x3c8] sm:$0xff]
    %v166 = vld [vmem:[#allocation2 + $0x3d0] sm:$0xff]
    %v167 = vld [vmem:[#allocation2 + $0x3d8] sm:$0xff]
    %v168 = vld [vmem:[#allocation2 + $0x3e0] sm:$0xff]
    %v169 = vld [vmem:[#allocation2 + $0x3e8] sm:$0xff]
    %v170 = vld [vmem:[#allocation2 + $0x3f0] sm:$0xff]
    %v171 = vld [vmem:[#allocation2 + $0x3f8] sm:$0xff]
    %v172 = vld [vmem:[#allocation2 + $0x400] sm:$0xff]
    %v173 = vld [vmem:[#allocation2 + $0x408] sm:$0xff]
    %v174 = vld [vmem:[#allocation2 + $0x410] sm:$0xff]
    %v175 = vld [vmem:[#allocation2 + $0x418] sm:$0xff]
    %v176 = vld [vmem:[#allocation2 + $0x420] sm:$0xff]
    %v177 = vld [vmem:[#allocation2 + $0x428] sm:$0xff]
    %v178 = vld [vmem:[#allocation2 + $0x430] sm:$0xff]
    %v179 = vld [vmem:[#allocation2 + $0x438] sm:$0xff]
    %v180 = vld [vmem:[#allocation2 + $0x440] sm:$0xff]
    %v181 = vld [vmem:[#allocation2 + $0x448] sm:$0xff]
    %v182 = vld [vmem:[#allocation2 + $0x450] sm:$0xff]
    %v183 = vld [vmem:[#allocation2 + $0x458] sm:$0xff]
    %v184 = vld [vmem:[#allocation2 + $0x460] sm:$0xff]
    %v185 = vld [vmem:[#allocation2 + $0x468] sm:$0xff]
    %v186 = vld [vmem:[#allocation2 + $0x470] sm:$0xff]
    %v187 = vld [vmem:[#allocation2 + $0x478] sm:$0xff]
    %v188 = vld [vmem:[#allocation2 + $0x480] sm:$0xff]
    %v189 = vld [vmem:[#allocation2 + $0x488] sm:$0xff]
    %v190 = vld [vmem:[#allocation2 + $0x490] sm:$0xff]
    %v191 = vld [vmem:[#allocation2 + $0x498] sm:$0xff]
    %v192 = vld [vmem:[#allocation2 + $0x4a0] sm:$0xff]
    %v193 = vld [vmem:[#allocation2 + $0x4a8] sm:$0xff]
    %v194 = vld [vmem:[#allocation2 + $0x4b0] sm:$0xff]
    %v195 = vld [vmem:[#allocation2 + $0x4b8] sm:$0xff]
    %v196 = vld [vmem:[#allocation2 + $0x4c0] sm:$0xff]
    %v197 = vld [vmem:[#allocation2 + $0x4c8] sm:$0xff]
    %v198 = vld [vmem:[#allocation2 + $0x4d0] sm:$0xff]
    %v199 = vld [vmem:[#allocation2 + $0x4d8] sm:$0xff]
    %v200 = vld [vmem:[#allocation2 + $0x4e0] sm:$0xff]
    %v201 = vld [vmem:[#allocation2 + $0x4e8] sm:$0xff]
    %v202 = vld [vmem:[#allocation2 + $0x4f0] sm:$0xff]
    %v203 = vld [vmem:[#allocation2 + $0x4f8] sm:$0xff]
    %v204 = vld [vmem:[#allocation2 + $0x500] sm:$0xff]
    %v205 = vld [vmem:[#allocation2 + $0x508] sm:$0xff]
    %v206 = vld [vmem:[#allocation2 + $0x510] sm:$0xff]
    %v207 = vld [vmem:[#allocation2 + $0x518] sm:$0xff]
    %v208 = vld [vmem:[#allocation2 + $0x520] sm:$0xff]
    %v209 = vld [vmem:[#allocation2 + $0x528] sm:$0xff]
    %v210 = vld [vmem:[#allocation2 + $0x530] sm:$0xff]
    %v211 = vld [vmem:[#allocation2 + $0x538] sm:$0xff]
    %v212 = vld [vmem:[#allocation2 + $0x540] sm:$0xff]
    %v213 = vld [vmem:[#allocation2 + $0x548] sm:$0xff]
    %v214 = vld [vmem:[#allocation2 + $0x550] sm:$0xff]
    %v215 = vld [vmem:[#allocation2 + $0x558] sm:$0xff]
    %v216 = vld [vmem:[#allocation2 + $0x560] sm:$0xff]
    %v217 = vld [vmem:[#allocation2 + $0x568] sm:$0xff]
    %v218 = vld [vmem:[#allocation2 + $0x570] sm:$0xff]
    %v219 = vld [vmem:[#allocation2 + $0x578] sm:$0xff]
    %v220 = vld [vmem:[#allocation2 + $0x580] sm:$0xff]
    %v221 = vld [vmem:[#allocation2 + $0x588] sm:$0xff]
    %v222 = vld [vmem:[#allocation2 + $0x590] sm:$0xff]
    %v223 = vld [vmem:[#allocation2 + $0x598] sm:$0xff]
    %v224 = vld [vmem:[#allocation2 + $0x5a0] sm:$0xff]
    %v225 = vld [vmem:[#allocation2 + $0x5a8] sm:$0xff]
    %v226 = vld [vmem:[#allocation2 + $0x5b0] sm:$0xff]
    %v227 = vld [vmem:[#allocation2 + $0x5b8] sm:$0xff]
    %v228 = vld [vmem:[#allocation2 + $0x5c0] sm:$0xff]
    %v229 = vld [vmem:[#allocation2 + $0x5c8] sm:$0xff]
    %v230 = vld [vmem:[#allocation2 + $0x5d0] sm:$0xff]
    %v231 = vld [vmem:[#allocation2 + $0x5d8] sm:$0xff]
    %v232 = vld [vmem:[#allocation2 + $0x5e0] sm:$0xff]
    %v233 = vld [vmem:[#allocation2 + $0x5e8] sm:$0xff]
    %v234 = vld [vmem:[#allocation2 + $0x5f0] sm:$0xff]
    %v235 = vld [vmem:[#allocation2 + $0x5f8] sm:$0xff]
    %v236 = vld [vmem:[#allocation2 + $0x600] sm:$0xff]
    %v237 = vld [vmem:[#allocation2 + $0x618] sm:$0xff]
    %v238 = vld [vmem:[#allocation2 + $0x630] sm:$0xff]
    %v239 = vld [vmem:[#allocation2 + $0x648] sm:$0xff]
    %v240 = vld [vmem:[#allocation2 + $0x660] sm:$0xff]
    %v241 = vld [vmem:[#allocation2 + $0x678] sm:$0xff]
    %v242 = vld [vmem:[#allocation2 + $0x690] sm:$0xff]
    %v243 = vld [vmem:[#allocation2 + $0x6a8] sm:$0xff]
    %v244 = vld [vmem:[#allocation2 + $0x6c0] sm:$0xff]
    %v245 = vld [vmem:[#allocation2 + $0x6d8] sm:$0xff]
    %v246 = vld [vmem:[#allocation2 + $0x6f0] sm:$0xff]
    %v247 = vld [vmem:[#allocation2 + $0x708] sm:$0xff]
    %v248 = vld [vmem:[#allocation2 + $0x720] sm:$0xff]
    %v249 = vld [vmem:[#allocation2 + $0x738] sm:$0xff]
    %v250 = vld [vmem:[#allocation2 + $0x750] sm:$0xff]
    %v251 = vld [vmem:[#allocation2 + $0x768] sm:$0xff]
    %v252 = vld [vmem:[#allocation2 + $0x780] sm:$0xff]
    %v253 = vld [vmem:[#allocation2 + $0x798] sm:$0xff]
    %v254 = vld [vmem:[#allocation2 + $0x7b0] sm:$0xff]
    %v255 = vld [vmem:[#allocation2 + $0x7c8] sm:$0xff]
    %v256 = vld [vmem:[#allocation2 + $0x7e0] sm:$0xff]
    %v257 = vld [vmem:[#allocation2 + $0x7f8] sm:$0xff]
    %v258 = vld [vmem:[#allocation2 + $0x810] sm:$0xff]
    %v259 = vld [vmem:[#allocation2 + $0x828] sm:$0xff]
    %v260 = vld [vmem:[#allocation2 + $0x840] sm:$0xff]
    %v261 = vld [vmem:[#allocation2 + $0x858] sm:$0xff]
    %v262 = vld [vmem:[#allocation2 + $0x870] sm:$0xff]
    %v263 = vld [vmem:[#allocation2 + $0x888] sm:$0xff]
    %v264 = vld [vmem:[#allocation2 + $0x8a0] sm:$0xff]
    %v265 = vld [vmem:[#allocation2 + $0x8b8] sm:$0xff]
    %v266 = vld [vmem:[#allocation2 + $0x8d0] sm:$0xff]
    %v267 = vld [vmem:[#allocation2 + $0x8e8] sm:$0xff]
    %v268 = vld [vmem:[#allocation2 + $0x900] sm:$0xff]
    %v269 = vld [vmem:[#allocation2 + $0x918] sm:$0xff]
    %v270 = vld [vmem:[#allocation2 + $0x930] sm:$0xff]
    %v271 = vld [vmem:[#allocation2 + $0x948] sm:$0xff]
    %v272 = vld [vmem:[#allocation2 + $0x960] sm:$0xff]
    %v273 = vld [vmem:[#allocation2 + $0x978] sm:$0xff]
    %v274 = vld [vmem:[#allocation2 + $0x990] sm:$0xff]
    %v275 = vld [vmem:[#allocation2 + $0x9a8] sm:$0xff]
    %v276 = vld [vmem:[#allocation2 + $0x9c0] sm:$0xff]
    %v277 = vld [vmem:[#allocation2 + $0x9d8] sm:$0xff]
    %v278 = vld [vmem:[#allocation2 + $0x9f0] sm:$0xff]
    %v279 = vld [vmem:[#allocation2 + $0xa08] sm:$0xff]
    %v280 = vld [vmem:[#allocation2 + $0xa20] sm:$0xff]
    %v281 = vld [vmem:[#allocation2 + $0xa38] sm:$0xff]
    %v282 = vld [vmem:[#allocation2 + $0xa50] sm:$0xff]
    %v283 = vld [vmem:[#allocation2 + $0xa68] sm:$0xff]
    %v284 = vld [vmem:[#allocation5] ss:$8 sm:$0x7]
    %s285 = scalar_lea.vmem [#allocation5], 1
    %v286 = vld [vmem:[%s285] ss:$8 sm:$0x7]
    %v287 = vld [vmem:[#allocation5 + $0x2] ss:$0 sm:$0xff]
    %v289 = vlaneseq
    %v290 = vshrl.u32 %v289, 7
    %v291 = vsub.s32 0, %v290
    %v292 = vrot.slane %v284, %v291
    %v293 = vlaneseq
    %v294 = vshrl.u32 %v293, 7
    %v295 = vsub.s32 1, %v294
    %v296 = vrot.slane %v284, %v295
    %v297 = vlaneseq
    %v298 = vshrl.u32 %v297, 7
    %v299 = vsub.s32 2, %v298
    %v300 = vrot.slane %v284, %v299
    %304 = vmatprep.subr.mxu0 %v45
    %305 = vmatpush1.msra.mxu0 %v44
    %306 = vmatprep.subr.mxu0 %v48
    %307 = vmatpush1.msra.mxu0 %v47
    %308 = vmatprep.subr.mxu0 %v51
    %309 = vmatpush1.msra.mxu0 %v50
    %310 = vmatprep.subr.mxu0 %v54
    %311 = vmatpush1.msra.mxu0 %v53
    %312 = vmatprep.subr.mxu0 %v57
    %313 = vmatpush1.msra.mxu0 %v56
    %314 = vmatprep.subr.mxu0 %v60
    %315 = vmatpush1.msra.mxu0 %v59
    %316 = vmatprep.subr.mxu0 %v63
    %317 = vmatpush1.msra.mxu0 %v62
    %318 = vmatprep.subr.mxu0 %v66
    %319 = vmatpush1.msra.mxu0 %v65
    %320 = vmatprep.subr.mxu0 %v69
    %321 = vmatpush1.msra.mxu0 %v68
    %322 = vmatprep.subr.mxu0 %v72
    %323 = vmatpush1.msra.mxu0 %v71
    %324 = vmatprep.subr.mxu0 %v75
    %325 = vmatpush1.msra.mxu0 %v74
    %326 = vmatprep.subr.mxu0 %v78
    %327 = vmatpush1.msra.mxu0 %v77
    %328 = vmatprep.subr.mxu0 %v81
    %329 = vmatpush1.msra.mxu0 %v80
    %330 = vmatprep.subr.mxu0 %v84
    %331 = vmatpush1.msra.mxu0 %v83
    %332 = vmatprep.subr.mxu0 %v87
    %333 = vmatpush1.msra.mxu0 %v86
    %334 = vmatprep.subr.mxu0 %v90
    %335 = vmatpush1.msra.mxu0 %v89
    %336 = vmatprep.subr.mxu0 0.0
    %337 = vmatpush1.msra.mxu0 0.0
    %338 = vmatprep.subr.mxu0 0.0
    %339 = vmatpush1.msra.mxu0 0.0
    %340 = vmatprep.subr.mxu0 0.0
    %341 = vmatpush1.msra.mxu0 0.0
    %342 = vmatprep.subr.mxu0 0.0
    %343 = vmatpush1.msra.mxu0 0.0
    %344 = vmatprep.subr.mxu0 0.0
    %345 = vmatpush1.msra.mxu0 0.0
    %346 = vmatprep.subr.mxu0 0.0
    %347 = vmatpush1.msra.mxu0 0.0
    %348 = vmatprep.subr.mxu0 0.0
    %349 = vmatpush1.msra.mxu0 0.0
    %350 = vmatprep.subr.mxu0 0.0
    %351 = vmatpush1.msra.mxu0 0.0
    %352 = vmatprep.subr.mxu0 0.0
    %353 = vmatpush1.msra.mxu0 0.0
    %354 = vmatprep.subr.mxu0 0.0
    %355 = vmatpush1.msra.mxu0 0.0
    %356 = vmatprep.subr.mxu0 0.0
    %357 = vmatpush1.msra.mxu0 0.0
    %358 = vmatprep.subr.mxu0 0.0
    %359 = vmatpush1.msra.mxu0 0.0
    %360 = vmatprep.subr.mxu0 0.0
    %361 = vmatpush1.msra.mxu0 0.0
    %362 = vmatprep.subr.mxu0 0.0
    %363 = vmatpush1.msra.mxu0 0.0
    %364 = vmatprep.subr.mxu0 0.0
    %365 = vmatpush1.msra.mxu0 0.0
    %366 = vmatprep.subr.mxu0 0.0
    %367 = vmatpush1.msra.mxu0 0.0
    %368 = vmatprep.mubr.f32.mxu0 0.0
    %369 = vmatmul.mubr.f32.gmra.mrb[0].mxu0 %v43
    %v370 = vpop.f32.mrb[0].mxu0
    %v371 = vadd.f32 %v292, %v370
    %v372 = vpop.f32.mrb[0].mxu0
    %v373 = vadd.f32 %v296, %v372
    %374 = vdwg.mxu0
    %375 = vmatprep.subr.mxu0 0.0
    %376 = vmatpush1.msra.mxu0 %v46
    %377 = vmatprep.subr.mxu0 0.0
    %378 = vmatpush1.msra.mxu0 %v49
    %379 = vmatprep.subr.mxu0 0.0
    %380 = vmatpush1.msra.mxu0 %v52
    %381 = vmatprep.subr.mxu0 0.0
    %382 = vmatpush1.msra.mxu0 %v55
    %383 = vmatprep.subr.mxu0 0.0
    %384 = vmatpush1.msra.mxu0 %v58
    %385 = vmatprep.subr.mxu0 0.0
    %386 = vmatpush1.msra.mxu0 %v61
    %387 = vmatprep.subr.mxu0 0.0
    %388 = vmatpush1.msra.mxu0 %v64
    %389 = vmatprep.subr.mxu0 0.0
    %390 = vmatpush1.msra.mxu0 %v67
    %391 = vmatprep.subr.mxu0 0.0
    %392 = vmatpush1.msra.mxu0 %v70
    %393 = vmatprep.subr.mxu0 0.0
    %394 = vmatpush1.msra.mxu0 %v73
    %395 = vmatprep.subr.mxu0 0.0
    %396 = vmatpush1.msra.mxu0 %v76
    %397 = vmatprep.subr.mxu0 0.0
    %398 = vmatpush1.msra.mxu0 %v79
    %399 = vmatprep.subr.mxu0 0.0
    %400 = vmatpush1.msra.mxu0 %v82
    %401 = vmatprep.subr.mxu0 0.0
    %402 = vmatpush1.msra.mxu0 %v85
    %403 = vmatprep.subr.mxu0 0.0
    %404 = vmatpush1.msra.mxu0 %v88
    %405 = vmatprep.subr.mxu0 0.0
    %406 = vmatpush1.msra.mxu0 %v91
    %407 = vmatprep.subr.mxu0 0.0
    %408 = vmatpush1.msra.mxu0 0.0
    %409 = vmatprep.subr.mxu0 0.0
    %410 = vmatpush1.msra.mxu0 0.0
    %411 = vmatprep.subr.mxu0 0.0
    %412 = vmatpush1.msra.mxu0 0.0
    %413 = vmatprep.subr.mxu0 0.0
    %414 = vmatpush1.msra.mxu0 0.0
    %415 = vmatprep.subr.mxu0 0.0
    %416 = vmatpush1.msra.mxu0 0.0
    %417 = vmatprep.subr.mxu0 0.0
    %418 = vmatpush1.msra.mxu0 0.0
    %419 = vmatprep.subr.mxu0 0.0
    %420 = vmatpush1.msra.mxu0 0.0
    %421 = vmatprep.subr.mxu0 0.0
    %422 = vmatpush1.msra.mxu0 0.0
    %423 = vmatprep.subr.mxu0 0.0
    %424 = vmatpush1.msra.mxu0 0.0
    %425 = vmatprep.subr.mxu0 0.0
    %426 = vmatpush1.msra.mxu0 0.0
    %427 = vmatprep.subr.mxu0 0.0
    %428 = vmatpush1.msra.mxu0 0.0
    %429 = vmatprep.subr.mxu0 0.0
    %430 = vmatpush1.msra.mxu0 0.0
    %431 = vmatprep.subr.mxu0 0.0
    %432 = vmatpush1.msra.mxu0 0.0
    %433 = vmatprep.subr.mxu0 0.0
    %434 = vmatpush1.msra.mxu0 0.0
    %435 = vmatprep.subr.mxu0 0.0
    %436 = vmatpush1.msra.mxu0 0.0
    %437 = vmatprep.subr.mxu0 0.0
    %438 = vmatpush1.msra.mxu0 0.0
    %439 = vmatprep.mubr.f32.mxu0 0.0
    %440 = vmatmul.mubr.f32.gmra.mrb[0].mxu0 %v43
    %v441 = vpop.f32.mrb[0].mxu0
    %v442 = vadd.f32 %v300, %v441
    %v443 = vpop.f32.mrb[0].mxu0
    %444 = vdwg.mxu0
    %v445 = vmax.f32 %v371, 0.0
    %v446 = vmax.f32 %v373, 0.0
    %v447 = vmax.f32 %v442, 0.0
    %v449 = vlaneseq
    %v450 = vshrl.u32 %v449, 7
    %v451 = vsub.s32 0, %v450
    %v452 = vrot.slane %v286, %v451
    %v453 = vlaneseq
    %v454 = vshrl.u32 %v453, 7
    %v455 = vsub.s32 1, %v454
    %v456 = vrot.slane %v286, %v455
    %v457 = vlaneseq
    %v458 = vshrl.u32 %v457, 7
    %v459 = vsub.s32 2, %v458
    %v460 = vrot.slane %v286, %v459
    %464 = vmatprep.subr.mxu0 %v93
    %465 = vmatpush1.msra.mxu0 %v92
    %466 = vmatprep.subr.mxu0 %v96
    %467 = vmatpush1.msra.mxu0 %v95
    %468 = vmatprep.subr.mxu0 %v99
    %469 = vmatpush1.msra.mxu0 %v98
    %470 = vmatprep.subr.mxu0 %v102
    %471 = vmatpush1.msra.mxu0 %v101
    %472 = vmatprep.subr.mxu0 %v105
    %473 = vmatpush1.msra.mxu0 %v104
    %474 = vmatprep.subr.mxu0 %v108
    %475 = vmatpush1.msra.mxu0 %v107
    %476 = vmatprep.subr.mxu0 %v111
    %477 = vmatpush1.msra.mxu0 %v110
    %478 = vmatprep.subr.mxu0 %v114
    %479 = vmatpush1.msra.mxu0 %v113
    %480 = vmatprep.subr.mxu0 %v117
    %481 = vmatpush1.msra.mxu0 %v116
    %482 = vmatprep.subr.mxu0 %v120
    %483 = vmatpush1.msra.mxu0 %v119
    %484 = vmatprep.subr.mxu0 %v123
    %485 = vmatpush1.msra.mxu0 %v122
    %486 = vmatprep.subr.mxu0 %v126
    %487 = vmatpush1.msra.mxu0 %v125
    %488 = vmatprep.subr.mxu0 %v129
    %489 = vmatpush1.msra.mxu0 %v128
    %490 = vmatprep.subr.mxu0 %v132
    %491 = vmatpush1.msra.mxu0 %v131
    %492 = vmatprep.subr.mxu0 %v135
    %493 = vmatpush1.msra.mxu0 %v134
    %494 = vmatprep.subr.mxu0 %v138
    %495 = vmatpush1.msra.mxu0 %v137
    %496 = vmatprep.subr.mxu0 %v141
    %497 = vmatpush1.msra.mxu0 %v140
    %498 = vmatprep.subr.mxu0 %v144
    %499 = vmatpush1.msra.mxu0 %v143
    %500 = vmatprep.subr.mxu0 %v147
    %501 = vmatpush1.msra.mxu0 %v146
    %502 = vmatprep.subr.mxu0 %v150
    %503 = vmatpush1.msra.mxu0 %v149
    %504 = vmatprep.subr.mxu0 %v153
    %505 = vmatpush1.msra.mxu0 %v152
    %506 = vmatprep.subr.mxu0 %v156
    %507 = vmatpush1.msra.mxu0 %v155
    %508 = vmatprep.subr.mxu0 %v159
    %509 = vmatpush1.msra.mxu0 %v158
    %510 = vmatprep.subr.mxu0 %v162
    %511 = vmatpush1.msra.mxu0 %v161
    %512 = vmatprep.subr.mxu0 %v165
    %513 = vmatpush1.msra.mxu0 %v164
    %514 = vmatprep.subr.mxu0 %v168
    %515 = vmatpush1.msra.mxu0 %v167
    %516 = vmatprep.subr.mxu0 %v171
    %517 = vmatpush1.msra.mxu0 %v170
    %518 = vmatprep.subr.mxu0 %v174
    %519 = vmatpush1.msra.mxu0 %v173
    %520 = vmatprep.subr.mxu0 %v177
    %521 = vmatpush1.msra.mxu0 %v176
    %522 = vmatprep.subr.mxu0 %v180
    %523 = vmatpush1.msra.mxu0 %v179
    %524 = vmatprep.subr.mxu0 %v183
    %525 = vmatpush1.msra.mxu0 %v182
    %526 = vmatprep.subr.mxu0 %v186
    %527 = vmatpush1.msra.mxu0 %v185
    %528 = vmatprep.mubr.f32.mxu0 %v446
    %529 = vmatmul.mubr.f32.gmra.mrb[0].mxu0 %v445
    %v530 = vpop.f32.mrb[0].mxu0
    %v531 = vadd.f32 %v452, %v530
    %v532 = vpop.f32.mrb[0].mxu0
    %v533 = vadd.f32 %v456, %v532
    %534 = vdwg.mxu0
    %535 = vmatprep.subr.mxu0 %v189
    %536 = vmatpush1.msra.mxu0 %v188
    %537 = vmatprep.subr.mxu0 %v192
    %538 = vmatpush1.msra.mxu0 %v191
    %539 = vmatprep.subr.mxu0 %v195
    %540 = vmatpush1.msra.mxu0 %v194
    %541 = vmatprep.subr.mxu0 %v198
    %542 = vmatpush1.msra.mxu0 %v197
    %543 = vmatprep.subr.mxu0 %v201
    %544 = vmatpush1.msra.mxu0 %v200
    %545 = vmatprep.subr.mxu0 %v204
    %546 = vmatpush1.msra.mxu0 %v203
    %547 = vmatprep.subr.mxu0 %v207
    %548 = vmatpush1.msra.mxu0 %v206
    %549 = vmatprep.subr.mxu0 %v210
    %550 = vmatpush1.msra.mxu0 %v209
    %551 = vmatprep.subr.mxu0 %v213
    %552 = vmatpush1.msra.mxu0 %v212
    %553 = vmatprep.subr.mxu0 %v216
    %554 = vmatpush1.msra.mxu0 %v215
    %555 = vmatprep.subr.mxu0 %v219
    %556 = vmatpush1.msra.mxu0 %v218
    %557 = vmatprep.subr.mxu0 %v222
    %558 = vmatpush1.msra.mxu0 %v221
    %559 = vmatprep.subr.mxu0 %v225
    %560 = vmatpush1.msra.mxu0 %v224
    %561 = vmatprep.subr.mxu0 %v228
    %562 = vmatpush1.msra.mxu0 %v227
    %563 = vmatprep.subr.mxu0 %v231
    %564 = vmatpush1.msra.mxu0 %v230
    %565 = vmatprep.subr.mxu0 %v234
    %566 = vmatpush1.msra.mxu0 %v233
    %567 = vmatprep.subr.mxu0 0.0
    %568 = vmatpush1.msra.mxu0 0.0
    %569 = vmatprep.subr.mxu0 0.0
    %570 = vmatpush1.msra.mxu0 0.0
    %571 = vmatprep.subr.mxu0 0.0
    %572 = vmatpush1.msra.mxu0 0.0
    %573 = vmatprep.subr.mxu0 0.0
    %574 = vmatpush1.msra.mxu0 0.0
    %575 = vmatprep.subr.mxu0 0.0
    %576 = vmatpush1.msra.mxu0 0.0
    %577 = vmatprep.subr.mxu0 0.0
    %578 = vmatpush1.msra.mxu0 0.0
    %579 = vmatprep.subr.mxu0 0.0
    %580 = vmatpush1.msra.mxu0 0.0
    %581 = vmatprep.subr.mxu0 0.0
    %582 = vmatpush1.msra.mxu0 0.0
    %583 = vmatprep.subr.mxu0 0.0
    %584 = vmatpush1.msra.mxu0 0.0
    %585 = vmatprep.subr.mxu0 0.0
    %586 = vmatpush1.msra.mxu0 0.0
    %587 = vmatprep.subr.mxu0 0.0
    %588 = vmatpush1.msra.mxu0 0.0
    %589 = vmatprep.subr.mxu0 0.0
    %590 = vmatpush1.msra.mxu0 0.0
    %591 = vmatprep.subr.mxu0 0.0
    %592 = vmatpush1.msra.mxu0 0.0
    %593 = vmatprep.subr.mxu0 0.0
    %594 = vmatpush1.msra.mxu0 0.0
    %595 = vmatprep.subr.mxu0 0.0
    %596 = vmatpush1.msra.mxu0 0.0
    %597 = vmatprep.subr.mxu0 0.0
    %598 = vmatpush1.msra.mxu0 0.0
    %599 = vmatprep.mubr.f32.mxu0 0.0
    %600 = vmatmul.mubr.f32.gmra.mrb[0].mxu0 %v447
    %v601 = vpop.f32.mrb[0].mxu0
    %v602 = vadd.f32 %v531, %v601
    %v603 = vpop.f32.mrb[0].mxu0
    %v604 = vadd.f32 %v533, %v603
    %605 = vdwg.mxu0
    %606 = vmatprep.subr.mxu0 0.0
    %607 = vmatpush1.msra.mxu0 %v94
    %608 = vmatprep.subr.mxu0 0.0
    %609 = vmatpush1.msra.mxu0 %v97
    %610 = vmatprep.subr.mxu0 0.0
    %611 = vmatpush1.msra.mxu0 %v100
    %612 = vmatprep.subr.mxu0 0.0
    %613 = vmatpush1.msra.mxu0 %v103
    %614 = vmatprep.subr.mxu0 0.0
    %615 = vmatpush1.msra.mxu0 %v106
    %616 = vmatprep.subr.mxu0 0.0
    %617 = vmatpush1.msra.mxu0 %v109
    %618 = vmatprep.subr.mxu0 0.0
    %619 = vmatpush1.msra.mxu0 %v112
    %620 = vmatprep.subr.mxu0 0.0
    %621 = vmatpush1.msra.mxu0 %v115
    %622 = vmatprep.subr.mxu0 0.0
    %623 = vmatpush1.msra.mxu0 %v118
    %624 = vmatprep.subr.mxu0 0.0
    %625 = vmatpush1.msra.mxu0 %v121
    %626 = vmatprep.subr.mxu0 0.0
    %627 = vmatpush1.msra.mxu0 %v124
    %628 = vmatprep.subr.mxu0 0.0
    %629 = vmatpush1.msra.mxu0 %v127
    %630 = vmatprep.subr.mxu0 0.0
    %631 = vmatpush1.msra.mxu0 %v130
    %632 = vmatprep.subr.mxu0 0.0
    %633 = vmatpush1.msra.mxu0 %v133
    %634 = vmatprep.subr.mxu0 0.0
    %635 = vmatpush1.msra.mxu0 %v136
    %636 = vmatprep.subr.mxu0 0.0
    %637 = vmatpush1.msra.mxu0 %v139
    %638 = vmatprep.subr.mxu0 0.0
    %639 = vmatpush1.msra.mxu0 %v142
    %640 = vmatprep.subr.mxu0 0.0
    %641 = vmatpush1.msra.mxu0 %v145
    %642 = vmatprep.subr.mxu0 0.0
    %643 = vmatpush1.msra.mxu0 %v148
    %644 = vmatprep.subr.mxu0 0.0
    %645 = vmatpush1.msra.mxu0 %v151
    %646 = vmatprep.subr.mxu0 0.0
    %647 = vmatpush1.msra.mxu0 %v154
    %648 = vmatprep.subr.mxu0 0.0
    %649 = vmatpush1.msra.mxu0 %v157
    %650 = vmatprep.subr.mxu0 0.0
    %651 = vmatpush1.msra.mxu0 %v160
    %652 = vmatprep.subr.mxu0 0.0
    %653 = vmatpush1.msra.mxu0 %v163
    %654 = vmatprep.subr.mxu0 0.0
    %655 = vmatpush1.msra.mxu0 %v166
    %656 = vmatprep.subr.mxu0 0.0
    %657 = vmatpush1.msra.mxu0 %v169
    %658 = vmatprep.subr.mxu0 0.0
    %659 = vmatpush1.msra.mxu0 %v172
    %660 = vmatprep.subr.mxu0 0.0
    %661 = vmatpush1.msra.mxu0 %v175
    %662 = vmatprep.subr.mxu0 0.0
    %663 = vmatpush1.msra.mxu0 %v178
    %664 = vmatprep.subr.mxu0 0.0
    %665 = vmatpush1.msra.mxu0 %v181
    %666 = vmatprep.subr.mxu0 0.0
    %667 = vmatpush1.msra.mxu0 %v184
    %668 = vmatprep.subr.mxu0 0.0
    %669 = vmatpush1.msra.mxu0 %v187
    %670 = vmatprep.mubr.f32.mxu0 %v446
    %671 = vmatmul.mubr.f32.gmra.mrb[0].mxu0 %v445
    %v672 = vpop.f32.mrb[0].mxu0
    %v673 = vadd.f32 %v460, %v672
    %v674 = vpop.f32.mrb[0].mxu0
    %675 = vdwg.mxu0
    %676 = vmatprep.subr.mxu0 0.0
    %677 = vmatpush1.msra.mxu0 %v190
    %678 = vmatprep.subr.mxu0 0.0
    %679 = vmatpush1.msra.mxu0 %v193
    %680 = vmatprep.subr.mxu0 0.0
    %681 = vmatpush1.msra.mxu0 %v196
    %682 = vmatprep.subr.mxu0 0.0
    %683 = vmatpush1.msra.mxu0 %v199
    %684 = vmatprep.subr.mxu0 0.0
    %685 = vmatpush1.msra.mxu0 %v202
    %686 = vmatprep.subr.mxu0 0.0
    %687 = vmatpush1.msra.mxu0 %v205
    %688 = vmatprep.subr.mxu0 0.0
    %689 = vmatpush1.msra.mxu0 %v208
    %690 = vmatprep.subr.mxu0 0.0
    %691 = vmatpush1.msra.mxu0 %v211
    %692 = vmatprep.subr.mxu0 0.0
    %693 = vmatpush1.msra.mxu0 %v214
    %694 = vmatprep.subr.mxu0 0.0
    %695 = vmatpush1.msra.mxu0 %v217
    %696 = vmatprep.subr.mxu0 0.0
    %697 = vmatpush1.msra.mxu0 %v220
    %698 = vmatprep.subr.mxu0 0.0
    %699 = vmatpush1.msra.mxu0 %v223
    %700 = vmatprep.subr.mxu0 0.0
    %701 = vmatpush1.msra.mxu0 %v226
    %702 = vmatprep.subr.mxu0 0.0
    %703 = vmatpush1.msra.mxu0 %v229
    %704 = vmatprep.subr.mxu0 0.0
    %705 = vmatpush1.msra.mxu0 %v232
    %706 = vmatprep.subr.mxu0 0.0
    %707 = vmatpush1.msra.mxu0 %v235
    %708 = vmatprep.subr.mxu0 0.0
    %709 = vmatpush1.msra.mxu0 0.0
    %710 = vmatprep.subr.mxu0 0.0
    %711 = vmatpush1.msra.mxu0 0.0
    %712 = vmatprep.subr.mxu0 0.0
    %713 = vmatpush1.msra.mxu0 0.0
    %714 = vmatprep.subr.mxu0 0.0
    %715 = vmatpush1.msra.mxu0 0.0
    %716 = vmatprep.subr.mxu0 0.0
    %717 = vmatpush1.msra.mxu0 0.0
    %718 = vmatprep.subr.mxu0 0.0
    %719 = vmatpush1.msra.mxu0 0.0
    %720 = vmatprep.subr.mxu0 0.0
    %721 = vmatpush1.msra.mxu0 0.0
    %722 = vmatprep.subr.mxu0 0.0
    %723 = vmatpush1.msra.mxu0 0.0
    %724 = vmatprep.subr.mxu0 0.0
    %725 = vmatpush1.msra.mxu0 0.0
    %726 = vmatprep.subr.mxu0 0.0
    %727 = vmatpush1.msra.mxu0 0.0
    %728 = vmatprep.subr.mxu0 0.0
    %729 = vmatpush1.msra.mxu0 0.0
    %730 = vmatprep.subr.mxu0 0.0
    %731 = vmatpush1.msra.mxu0 0.0
    %732 = vmatprep.subr.mxu0 0.0
    %733 = vmatpush1.msra.mxu0 0.0
    %734 = vmatprep.subr.mxu0 0.0
    %735 = vmatpush1.msra.mxu0 0.0
    %736 = vmatprep.subr.mxu0 0.0
    %737 = vmatpush1.msra.mxu0 0.0
    %738 = vmatprep.subr.mxu0 0.0
    %739 = vmatpush1.msra.mxu0 0.0
    %740 = vmatprep.mubr.f32.mxu0 0.0
    %741 = vmatmul.mubr.f32.gmra.mrb[0].mxu0 %v447
    %v742 = vpop.f32.mrb[0].mxu0
    %v743 = vadd.f32 %v673, %v742
    %v744 = vpop.f32.mrb[0].mxu0
    %745 = vdwg.mxu0
    %v746 = vmax.f32 %v602, 0.0
    %v747 = vmax.f32 %v604, 0.0
    %v748 = vmax.f32 %v743, 0.0
    %749 = vmatprep.subr.mxu0 0.0
    %750 = vmatpush1.msra.mxu0 %v236
    %751 = vmatprep.subr.mxu0 0.0
    %752 = vmatpush1.msra.mxu0 %v237
    %753 = vmatprep.subr.mxu0 0.0
    %754 = vmatpush1.msra.mxu0 %v238
    %755 = vmatprep.subr.mxu0 0.0
    %756 = vmatpush1.msra.mxu0 %v239
    %757 = vmatprep.subr.mxu0 0.0
    %758 = vmatpush1.msra.mxu0 %v240
    %759 = vmatprep.subr.mxu0 0.0
    %760 = vmatpush1.msra.mxu0 %v241
    %761 = vmatprep.subr.mxu0 0.0
    %762 = vmatpush1.msra.mxu0 %v242
    %763 = vmatprep.subr.mxu0 0.0
    %764 = vmatpush1.msra.mxu0 %v243
    %765 = vmatprep.subr.mxu0 0.0
    %766 = vmatpush1.msra.mxu0 %v244
    %767 = vmatprep.subr.mxu0 0.0
    %768 = vmatpush1.msra.mxu0 %v245
    %769 = vmatprep.subr.mxu0 0.0
    %770 = vmatpush1.msra.mxu0 %v246
    %771 = vmatprep.subr.mxu0 0.0
    %772 = vmatpush1.msra.mxu0 %v247
    %773 = vmatprep.subr.mxu0 0.0
    %774 = vmatpush1.msra.mxu0 %v248
    %775 = vmatprep.subr.mxu0 0.0
    %776 = vmatpush1.msra.mxu0 %v249
    %777 = vmatprep.subr.mxu0 0.0
    %778 = vmatpush1.msra.mxu0 %v250
    %779 = vmatprep.subr.mxu0 0.0
    %780 = vmatpush1.msra.mxu0 %v251
    %781 = vmatprep.subr.mxu0 0.0
    %782 = vmatpush1.msra.mxu0 %v252
    %783 = vmatprep.subr.mxu0 0.0
    %784 = vmatpush1.msra.mxu0 %v253
    %785 = vmatprep.subr.mxu0 0.0
    %786 = vmatpush1.msra.mxu0 %v254
    %787 = vmatprep.subr.mxu0 0.0
    %788 = vmatpush1.msra.mxu0 %v255
    %789 = vmatprep.subr.mxu0 0.0
    %790 = vmatpush1.msra.mxu0 %v256
    %791 = vmatprep.subr.mxu0 0.0
    %792 = vmatpush1.msra.mxu0 %v257
    %793 = vmatprep.subr.mxu0 0.0
    %794 = vmatpush1.msra.mxu0 %v258
    %795 = vmatprep.subr.mxu0 0.0
    %796 = vmatpush1.msra.mxu0 %v259
    %797 = vmatprep.subr.mxu0 0.0
    %798 = vmatpush1.msra.mxu0 %v260
    %799 = vmatprep.subr.mxu0 0.0
    %800 = vmatpush1.msra.mxu0 %v261
    %801 = vmatprep.subr.mxu0 0.0
    %802 = vmatpush1.msra.mxu0 %v262
    %803 = vmatprep.subr.mxu0 0.0
    %804 = vmatpush1.msra.mxu0 %v263
    %805 = vmatprep.subr.mxu0 0.0
    %806 = vmatpush1.msra.mxu0 %v264
    %807 = vmatprep.subr.mxu0 0.0
    %808 = vmatpush1.msra.mxu0 %v265
    %809 = vmatprep.subr.mxu0 0.0
    %810 = vmatpush1.msra.mxu0 %v266
    %811 = vmatprep.subr.mxu0 0.0
    %812 = vmatpush1.msra.mxu0 %v267
    %813 = vmatprep.mubr.f32.mxu0 %v747
    %814 = vmatmul.mubr.f32.gmra.mrb[0].mxu0 %v746
    %v815 = vpop.f32.mrb[0].mxu0
    %v816 = vadd.f32 %v287, %v815
    %v817 = vpop.f32.mrb[0].mxu0
    %818 = vdwg.mxu0
    %819 = vmatprep.subr.mxu0 0.0
    %820 = vmatpush1.msra.mxu0 %v268
    %821 = vmatprep.subr.mxu0 0.0
    %822 = vmatpush1.msra.mxu0 %v269
    %823 = vmatprep.subr.mxu0 0.0
    %824 = vmatpush1.msra.mxu0 %v270
    %825 = vmatprep.subr.mxu0 0.0
    %826 = vmatpush1.msra.mxu0 %v271
    %827 = vmatprep.subr.mxu0 0.0
    %828 = vmatpush1.msra.mxu0 %v272
    %829 = vmatprep.subr.mxu0 0.0
    %830 = vmatpush1.msra.mxu0 %v273
    %831 = vmatprep.subr.mxu0 0.0
    %832 = vmatpush1.msra.mxu0 %v274
    %833 = vmatprep.subr.mxu0 0.0
    %834 = vmatpush1.msra.mxu0 %v275
    %835 = vmatprep.subr.mxu0 0.0
    %836 = vmatpush1.msra.mxu0 %v276
    %837 = vmatprep.subr.mxu0 0.0
    %838 = vmatpush1.msra.mxu0 %v277
    %839 = vmatprep.subr.mxu0 0.0
    %840 = vmatpush1.msra.mxu0 %v278
    %841 = vmatprep.subr.mxu0 0.0
    %842 = vmatpush1.msra.mxu0 %v279
    %843 = vmatprep.subr.mxu0 0.0
    %844 = vmatpush1.msra.mxu0 %v280
    %845 = vmatprep.subr.mxu0 0.0
    %846 = vmatpush1.msra.mxu0 %v281
    %847 = vmatprep.subr.mxu0 0.0
    %848 = vmatpush1.msra.mxu0 %v282
    %849 = vmatprep.subr.mxu0 0.0
    %850 = vmatpush1.msra.mxu0 %v283
    %851 = vmatprep.subr.mxu0 0.0
    %852 = vmatpush1.msra.mxu0 0.0
    %853 = vmatprep.subr.mxu0 0.0
    %854 = vmatpush1.msra.mxu0 0.0
    %855 = vmatprep.subr.mxu0 0.0
    %856 = vmatpush1.msra.mxu0 0.0
    %857 = vmatprep.subr.mxu0 0.0
    %858 = vmatpush1.msra.mxu0 0.0
    %859 = vmatprep.subr.mxu0 0.0
    %860 = vmatpush1.msra.mxu0 0.0
    %861 = vmatprep.subr.mxu0 0.0
    %862 = vmatpush1.msra.mxu0 0.0
    %863 = vmatprep.subr.mxu0 0.0
    %864 = vmatpush1.msra.mxu0 0.0
    %865 = vmatprep.subr.mxu0 0.0
    %866 = vmatpush1.msra.mxu0 0.0
    %867 = vmatprep.subr.mxu0 0.0
    %868 = vmatpush1.msra.mxu0 0.0
    %869 = vmatprep.subr.mxu0 0.0
    %870 = vmatpush1.msra.mxu0 0.0
    %871 = vmatprep.subr.mxu0 0.0
    %872 = vmatpush1.msra.mxu0 0.0
    %873 = vmatprep.subr.mxu0 0.0
    %874 = vmatpush1.msra.mxu0 0.0
    %875 = vmatprep.subr.mxu0 0.0
    %876 = vmatpush1.msra.mxu0 0.0
    %877 = vmatprep.subr.mxu0 0.0
    %878 = vmatpush1.msra.mxu0 0.0
    %879 = vmatprep.subr.mxu0 0.0
    %880 = vmatpush1.msra.mxu0 0.0
    %881 = vmatprep.subr.mxu0 0.0
    %882 = vmatpush1.msra.mxu0 0.0
    %883 = vmatprep.mubr.f32.mxu0 0.0
    %884 = vmatmul.mubr.f32.gmra.mrb[0].mxu0 %v748
    %v885 = vpop.f32.mrb[0].mxu0
    %v886 = vadd.f32 %v816, %v885
    %v887 = vpop.f32.mrb[0].mxu0
    %888 = vdwg.mxu0
    %889 = vst [vmem:[#allocation7] sm:$0xff] %v445
    %890 = vst [vmem:[%s4] sm:$0xff] %v886
    // Predicated region
    $region22: #{fwd.1} parent=1 // pred_check
      _
    $region23: #{fwd.1} parent=1 // pred_check_branch
      %892 = sbr.rel (0) target = $region25
    $region24: #{fwd.1} parent=1 // pred_region
      %s894 = ssub.s32 128, 128
      %895 = vsyncadd [#allocation4], %s894
      %s897 = sshll.u32 [#allocation7], 4
      %s898 = int_to_ptr.vmem [resolvable:$true] %s897
      %900 = dma.vmem_to_hbm [thread:$0]  %s898, 128, %s3, [#allocation4]
    $region25: #{fwd.1} parent=1 // pred_fallthru
      _
    // Predicated region
    $region26: #{fwd.1} parent=1 // pred_check
      _
    $region27: #{fwd.1} parent=1 // pred_check_branch
      %902 = sbr.rel (0) target = $region29
    $region28: #{fwd.1} parent=1 // pred_region
      _
    $region29: #{fwd.1} parent=1 // pred_fallthru
      _
    // Predicated region
    $region30: #{fwd.1} parent=1 // pred_check
      _
    $region31: #{fwd.1} parent=1 // pred_check_branch
      %904 = sbr.rel (0) target = $region33
    $region32: #{fwd.1} parent=1 // pred_region
      %905 = dma.done [#allocation4], 128
    $region33: #{fwd.1} parent=1 // pred_fallthru
      _
    // Predicated region
    $region34: #{fwd.1} parent=1 // pred_check
      _
    $region35: #{fwd.1} parent=1 // pred_check_branch
      %907 = sbr.rel (0) target = $region37
    $region36: #{fwd.1} parent=1 // pred_region
      _
    $region37: #{fwd.1} parent=1 // pred_fallthru
      _
    %908 = vsyncpa [#allocation3], 1
    %909 = vsyncpa [#allocation6], 1
    %910 = vsyncpa [#allocation4], 1

</llo_original>
